<compile_context>
chip_gen: v5e
topology: v5e:2x2
jax: 0.10.0
libtpu: 0.0.40
codegen_flags: <defaults>
</compile_context>

<pallas_src>
import jax
import jax.numpy as jnp
from jax.experimental import pallas as pl
from jax.experimental.pallas import tpu as pltpu


def _biclassify_kernel(x_ref, w_ref, b_ref, o_ref):
    """One grid step handles one batch tile; full K, no reduction carry.

    x_ref: (TB, K) f32 VMEM  -- input tile
    w_ref: (2, K)  f32 VMEM  -- full weight, lane-dense, resident across steps
    b_ref: (2,)    f32 SMEM  -- bias scalars
    o_ref: (TB, 2) f32 VMEM  -- softmax probabilities
    """
    x = x_ref[...]                      # (TB, K)
    w = w_ref[...]                      # (2, K)

    # Logits: VPU broadcast-multiply + XLU lane reduction (avoids MXU, N=2).
    l0 = jnp.sum(x * w[0:1, :], axis=-1, keepdims=True) + b_ref[0]   # (TB, 1)
    l1 = jnp.sum(x * w[1:2, :], axis=-1, keepdims=True) + b_ref[1]   # (TB, 1)

    # 2-class softmax, max-subtracted, exact; single reciprocal, single store.
    m = jnp.maximum(l0, l1)
    e0 = jnp.exp(l0 - m)
    e1 = jnp.exp(l1 - m)
    inv = 1.0 / (e0 + e1)
    probs = jnp.concatenate([e0 * inv, e1 * inv], axis=-1)           # (TB, 2)
    o_ref[...] = probs.astype(o_ref.dtype)


def biclassify_header_two(x, w, b, *, tb=None):
    """x: (B, K) f32; w: (2, K) f32 (PyTorch Linear weight layout); b: (2,) f32."""
    B, K = x.shape
    assert w.shape == (2, K)
    assert b.shape == (2,)
    if tb is None:
        # Small batches: single block. Larger batches: sublane-aligned batch
        # tiles, full K per tile (2 bufs x 256 x K x 4B stays well under the
        # scoped VMEM limit on v5e/v6e/v7x).
        tb = B if B <= 256 else 256
    assert B % tb == 0, "batch must be divisible by the batch tile"

    return pl.pallas_call(
        _biclassify_kernel,
        out_shape=jax.ShapeDtypeStruct((B, 2), jnp.float32),
        grid_spec=pltpu.PrefetchScalarGridSpec(
            num_scalar_prefetch=0,
            grid=(B // tb,),
            in_specs=[
                pl.BlockSpec((tb, K), lambda i: (i, 0)),              # x: batch tile, full K
                pl.BlockSpec((2, K), lambda i: (0, 0)),               # weight, lane-dense, resident
                pl.BlockSpec(memory_space=pltpu.MemorySpace.SMEM),    # bias scalars in SMEM
            ],
            out_specs=pl.BlockSpec((tb, 2), lambda i: (i, 0)),
        ),
        compiler_params=pltpu.CompilerParams(
            dimension_semantics=("parallel",),   # batch axis; v7x can split across TCs
        ),
    )(x, w, b)


if __name__ == "__main__":
    seq_len = 8
    in_features = seq_len * 768          # 6144
    batch = 2

    key = jax.random.PRNGKey(0)
    kx, kw, kb = jax.random.split(key, 3)

    # Deterministic synthetic parameters (PyTorch Linear: weight (2, K), bias (2,)).
    x = jax.random.normal(kx, (batch, in_features), dtype=jnp.float32)
    w = jax.random.normal(kw, (2, in_features), dtype=jnp.float32) * 0.02
    b = jax.random.normal(kb, (2,), dtype=jnp.float32) * 0.02

    out = biclassify_header_two(x, w, b)
    out = jax.block_until_ready(out)

    # Pure-JAX reference check (highest-precision matmul to match the f32 VPU reduction).
    logits_ref = jnp.dot(x, w.T, precision=jax.lax.Precision.HIGHEST) + b
    ref = jax.nn.softmax(logits_ref, axis=1)
    assert out.shape == (batch, 2)
    assert jnp.allclose(out, ref, atol=1e-5, rtol=1e-5), (out, ref)
    assert jnp.allclose(jnp.sum(out, axis=1), 1.0, atol=1e-5)

    print("KERNEL_OK")
</pallas_src>

<mosaic_0001>
module attributes {stable_mosaic.version = 11 : i64} {
  func.func @_biclassify_kernel(%arg0: i32, %arg1: memref<2x6144xf32, #tpu.memory_space<vmem>>, %arg2: memref<2x6144xf32, #tpu.memory_space<vmem>>, %arg3: memref<2xf32, #tpu.memory_space<smem>>, %arg4: memref<2x2xf32, #tpu.memory_space<vmem>>) attributes {dimension_semantics = [#tpu.dimension_semantics<parallel>], iteration_bounds = array<i64: 1>, scalar_prefetch = 0 : i64, scratch_operands = 0 : i64, tpu.core_type = #tpu.core_type<tc>, window_params = [{transform_indices = @transform_0, window_bounds = array<i64: 2, 6144>}, {pipeline_mode = #tpu.pipeline_mode<synchronous>, transform_indices = @transform_1, window_bounds = array<i64: 2, 6144>}, {transform_indices = @transform_2, window_bounds = array<i64: 2>}, {transform_indices = @transform_3, window_bounds = array<i64: 2, 2>}]} {
    %c0 = arith.constant 0 : index
    %c0_0 = arith.constant 0 : index
    %0 = vector.load %arg1[%c0, %c0_0] : memref<2x6144xf32, #tpu.memory_space<vmem>>, vector<2x6144xf32>
    %c0_1 = arith.constant 0 : index
    %c0_2 = arith.constant 0 : index
    %1 = vector.load %arg2[%c0_1, %c0_2] : memref<2x6144xf32, #tpu.memory_space<vmem>>, vector<2x6144xf32>
    %2 = vector.extract_strided_slice %1 {offsets = [0, 0], sizes = [1, 6144], strides = [1, 1]} : vector<2x6144xf32> to vector<1x6144xf32>
    %3 = vector.broadcast %2 : vector<1x6144xf32> to vector<2x6144xf32>
    %4 = arith.mulf %0, %3 : vector<2x6144xf32>
    %cst = arith.constant dense<0.000000e+00> : vector<2xf32>
    %5 = vector.multi_reduction <add>, %4, %cst [1] : vector<2x6144xf32> to vector<2xf32>
    %6 = vector.shape_cast %5 : vector<2xf32> to vector<2x1xf32>
    %c0_3 = arith.constant 0 : index
    %7 = memref.load %arg3[%c0_3] : memref<2xf32, #tpu.memory_space<smem>>
    %8 = vector.broadcast %7 : f32 to vector<2x1xf32>
    %9 = arith.addf %6, %8 : vector<2x1xf32>
    %10 = vector.extract_strided_slice %1 {offsets = [1, 0], sizes = [1, 6144], strides = [1, 1]} : vector<2x6144xf32> to vector<1x6144xf32>
    %11 = vector.broadcast %10 : vector<1x6144xf32> to vector<2x6144xf32>
    %12 = arith.mulf %0, %11 : vector<2x6144xf32>
    %cst_4 = arith.constant dense<0.000000e+00> : vector<2xf32>
    %13 = vector.multi_reduction <add>, %12, %cst_4 [1] : vector<2x6144xf32> to vector<2xf32>
    %14 = vector.shape_cast %13 : vector<2xf32> to vector<2x1xf32>
    %c1 = arith.constant 1 : index
    %15 = memref.load %arg3[%c1] : memref<2xf32, #tpu.memory_space<smem>>
    %16 = vector.broadcast %15 : f32 to vector<2x1xf32>
    %17 = arith.addf %14, %16 : vector<2x1xf32>
    %18 = arith.maximumf %9, %17 : vector<2x1xf32>
    %19 = arith.subf %9, %18 : vector<2x1xf32>
    %20 = math.exp %19 : vector<2x1xf32>
    %21 = arith.subf %17, %18 : vector<2x1xf32>
    %22 = math.exp %21 : vector<2x1xf32>
    %23 = arith.addf %20, %22 : vector<2x1xf32>
    %cst_5 = arith.constant 1.000000e+00 : f32
    %24 = vector.broadcast %cst_5 : f32 to vector<2x1xf32>
    %25 = arith.divf %24, %23 : vector<2x1xf32>
    %26 = arith.mulf %20, %25 : vector<2x1xf32>
    %27 = arith.mulf %22, %25 : vector<2x1xf32>
    %28 = tpu.concatenate %26, %27 in 1 : vector<2x1xf32>, vector<2x1xf32> -> vector<2x2xf32>
    %c0_6 = arith.constant 0 : index
    %c0_7 = arith.constant 0 : index
    %29 = vector.load %arg4[%c0_6, %c0_7] : memref<2x2xf32, #tpu.memory_space<vmem>>, vector<2x2xf32>
    tpu.vector_store %arg4[%c0_6, %c0_7], %28 {strides = array<i32>} : memref<2x2xf32, #tpu.memory_space<vmem>>, vector<2x2xf32>,
    return
  }
  func.func @transform_0(%arg0: i32) -> (i32, i32) {
    %c0_i32 = arith.constant 0 : i32
    %c0_i32_0 = arith.constant 0 : i32
    return %arg0, %c0_i32 : i32, i32
  }
  func.func @transform_1(%arg0: i32) -> (i32, i32) {
    %c0_i32 = arith.constant 0 : i32
    %c0_i32_0 = arith.constant 0 : i32
    %c0_i32_1 = arith.constant 0 : i32
    return %c0_i32, %c0_i32_0 : i32, i32
  }
  func.func @transform_2(%arg0: i32) -> i32 {
    %c0_i32 = arith.constant 0 : i32
    %c0_i32_0 = arith.constant 0 : i32
    return %c0_i32 : i32
  }
  func.func @transform_3(%arg0: i32) -> (i32, i32) {
    %c0_i32 = arith.constant 0 : i32
    %c0_i32_0 = arith.constant 0 : i32
    return %arg0, %c0_i32 : i32, i32
  }
}

</mosaic_0001>

<llo_original>
// kernel: tpu_custom_call.1
$region0: #{tpu_custom_call.1}
  #allocation0 [shape = 'u32[]', space=smem, size = 0x4, offset = 0x4, fixed_abs, tag = 'smem constant byte address 0x4 - core index']
  #allocation1 [shape = 'u32[72,128]{1,0:T(1,128)}', space=vmem, size = 0x9000, scoped, tag = 'internal scratch']
  %s0 = inlined_call_operand.hbm [shape: f32[2,6144], index: 0, kind: input, shape index: {}]
  %s1 = inlined_call_operand.hbm [shape: f32[2,6144], index: 1, kind: input, shape index: {}]
  %s2 = inlined_call_operand.vmem [shape: f32[2], index: 2, kind: input, shape index: {}]
  %s3 = inlined_call_operand.hbm [shape: f32[2,2], index: 3, kind: output, shape index: {}]
  %s4 = sld [smem:[#allocation0]]
  $region34: #{tpu_custom_call.1} parent=0
    _
  %s6 = ssub.s32 1, %s4
  %s7 = scalar_select 0, %s6, %s4
  $region1: #{tpu_custom_call.1} parent=0
    #allocation2 [shape = 'u8[49152]{0}', space=vmem, size = 0xc000, scoped, tag = 'input window, operand 0, single buffered']
    #allocation3 [shape = 's32[1]{0}', space=sflag, size = 0x4, scoped, tag = 'scoped memory for tpu_custom_call.1']
    #allocation4 [shape = 's32[1]{0}', space=sflag, size = 0x4, scoped, tag = 'scoped memory for tpu_custom_call.1']
    #allocation5 [shape = 's32[1]{0}', space=sflag, size = 0x4, scoped, tag = 'scoped memory for tpu_custom_call.1']
    #allocation6 [shape = 'u8[49152]{0}', space=vmem, size = 0xc000, scoped, tag = 'input window, operand 1, single buffered']
    #allocation7 [shape = 's32[1]{0}', space=sflag, size = 0x4, scoped, tag = 'scoped memory for tpu_custom_call.1']
    #allocation8 [shape = 'u8[512]{0}', space=smem, size = 0x200, scoped, tag = 'input window, operand 2, single buffered']
    #allocation9 [shape = 'u8[1024]{0}', space=vmem, size = 0x400, scoped, tag = 'output window, operand 0, single buffered']
    %8 = vsyncpa [#allocation3], 0
    %9 = vsyncpa [#allocation7], 0
    %10 = vsyncpa [#allocation5], 0
    %11 = vsyncpa [#allocation4], 0
    // Predicated region
    $region2: #{tpu_custom_call.1} parent=1 // pred_check
      _
    $region3: #{tpu_custom_call.1} parent=1 // pred_check_branch
      %13 = sbr.rel (0) target = $region5
    $region4: #{tpu_custom_call.1} parent=1 // pred_region
      %15 = vsyncadd [#allocation3], 0
      %s17 = sshll.u32 %s0, 4
      %s18 = int_to_ptr.hbm [resolvable:$true] %s17
      %s19 = sshll.u32 [#allocation2], 4
      %s20 = int_to_ptr.vmem [resolvable:$true] %s19
      %22 = dma.hbm_to_vmem [thread:$0]  %s18, 1536, %s20, [#allocation3]
    $region5: #{tpu_custom_call.1} parent=1 // pred_fallthru
      _
    // Predicated region
    $region6: #{tpu_custom_call.1} parent=1 // pred_check
      _
    $region7: #{tpu_custom_call.1} parent=1 // pred_check_branch
      %24 = sbr.rel (0) target = $region9
    $region8: #{tpu_custom_call.1} parent=1 // pred_region
      %26 = vsyncadd [#allocation7], 0
      %s28 = sshll.u32 %s1, 4
      %s29 = int_to_ptr.hbm [resolvable:$true] %s28
      %s30 = sshll.u32 [#allocation6], 4
      %s31 = int_to_ptr.vmem [resolvable:$true] %s30
      %33 = dma.hbm_to_vmem [thread:$0]  %s29, 1536, %s31, [#allocation7]
    $region9: #{tpu_custom_call.1} parent=1 // pred_fallthru
      _
    // Predicated region
    $region10: #{tpu_custom_call.1} parent=1 // pred_check
      _
    $region11: #{tpu_custom_call.1} parent=1 // pred_check_branch
      %35 = sbr.rel (0) target = $region13
    $region12: #{tpu_custom_call.1} parent=1 // pred_region
      %37 = vsyncadd [#allocation5], 0
      %s39 = sshll.u32 %s2, 4
      %s40 = int_to_ptr.vmem [resolvable:$true] %s39
      %42 = dma.vmem_to_smem %s40, 16, [#allocation8], [#allocation5]
    $region13: #{tpu_custom_call.1} parent=1 // pred_fallthru
      _
    // Predicated region
    $region14: #{tpu_custom_call.1} parent=1 // pred_check
      _
    $region15: #{tpu_custom_call.1} parent=1 // pred_check_branch
      %44 = sbr.rel (0) target = $region17
    $region16: #{tpu_custom_call.1} parent=1 // pred_region
      %46 = dma.done [#allocation3], 1536
    $region17: #{tpu_custom_call.1} parent=1 // pred_fallthru
      _
    // Predicated region
    $region18: #{tpu_custom_call.1} parent=1 // pred_check
      _
    $region19: #{tpu_custom_call.1} parent=1 // pred_check_branch
      %48 = sbr.rel (0) target = $region21
    $region20: #{tpu_custom_call.1} parent=1 // pred_region
      %50 = dma.done [#allocation7], 1536
    $region21: #{tpu_custom_call.1} parent=1 // pred_fallthru
      _
    // Predicated region
    $region22: #{tpu_custom_call.1} parent=1 // pred_check
      _
    $region23: #{tpu_custom_call.1} parent=1 // pred_check_branch
      %52 = sbr.rel (0) target = $region25
    $region24: #{tpu_custom_call.1} parent=1 // pred_region
      %54 = dma.done [#allocation5], 16
    $region25: #{tpu_custom_call.1} parent=1 // pred_fallthru
      _
    %55 = sfence
    %v56 = vld [vmem:[#allocation2] sm:$0xff]
    %v57 = vld [vmem:[#allocation2 + $0x8] sm:$0xff]
    %v58 = vld [vmem:[#allocation2 + $0x10] sm:$0xff]
    %v59 = vld [vmem:[#allocation2 + $0x18] sm:$0xff]
    %v60 = vld [vmem:[#allocation2 + $0x20] sm:$0xff]
    %v61 = vld [vmem:[#allocation2 + $0x28] sm:$0xff]
    %v62 = vld [vmem:[#allocation2 + $0x30] sm:$0xff]
    %v63 = vld [vmem:[#allocation2 + $0x38] sm:$0xff]
    %v64 = vld [vmem:[#allocation2 + $0x40] sm:$0xff]
    %v65 = vld [vmem:[#allocation2 + $0x48] sm:$0xff]
    %v66 = vld [vmem:[#allocation2 + $0x50] sm:$0xff]
    %v67 = vld [vmem:[#allocation2 + $0x58] sm:$0xff]
    %v68 = vld [vmem:[#allocation6] sm:$0xff]
    %v69 = vld [vmem:[#allocation6 + $0x8] sm:$0xff]
    %v70 = vld [vmem:[#allocation6 + $0x10] sm:$0xff]
    %v71 = vld [vmem:[#allocation6 + $0x18] sm:$0xff]
    %v72 = vld [vmem:[#allocation6 + $0x20] sm:$0xff]
    %v73 = vld [vmem:[#allocation6 + $0x28] sm:$0xff]
    %v74 = vld [vmem:[#allocation6 + $0x30] sm:$0xff]
    %v75 = vld [vmem:[#allocation6 + $0x38] sm:$0xff]
    %v76 = vld [vmem:[#allocation6 + $0x40] sm:$0xff]
    %v77 = vld [vmem:[#allocation6 + $0x48] sm:$0xff]
    %v78 = vld [vmem:[#allocation6 + $0x50] sm:$0xff]
    %v79 = vld [vmem:[#allocation6 + $0x58] sm:$0xff]
    %v92 = vperm.slane %v68, 0
    %v93 = vperm.slane %v68, 2
    %v94 = vperm.slane %v68, 4
    %v95 = vperm.slane %v68, 6
    %v96 = vperm.slane %v69, 0
    %v97 = vperm.slane %v69, 2
    %v98 = vperm.slane %v69, 4
    %v99 = vperm.slane %v69, 6
    %v100 = vperm.slane %v70, 0
    %v101 = vperm.slane %v70, 2
    %v102 = vperm.slane %v70, 4
    %v103 = vperm.slane %v70, 6
    %v104 = vperm.slane %v71, 0
    %v105 = vperm.slane %v71, 2
    %v106 = vperm.slane %v71, 4
    %v107 = vperm.slane %v71, 6
    %v108 = vperm.slane %v72, 0
    %v109 = vperm.slane %v72, 2
    %v110 = vperm.slane %v72, 4
    %v111 = vperm.slane %v72, 6
    %v112 = vperm.slane %v73, 0
    %v113 = vperm.slane %v73, 2
    %v114 = vperm.slane %v73, 4
    %v115 = vperm.slane %v73, 6
    %v116 = vperm.slane %v74, 0
    %v117 = vperm.slane %v74, 2
    %v118 = vperm.slane %v74, 4
    %v119 = vperm.slane %v74, 6
    %v120 = vperm.slane %v75, 0
    %v121 = vperm.slane %v75, 2
    %v122 = vperm.slane %v75, 4
    %v123 = vperm.slane %v75, 6
    %v124 = vperm.slane %v76, 0
    %v125 = vperm.slane %v76, 2
    %v126 = vperm.slane %v76, 4
    %v127 = vperm.slane %v76, 6
    %v128 = vperm.slane %v77, 0
    %v129 = vperm.slane %v77, 2
    %v130 = vperm.slane %v77, 4
    %v131 = vperm.slane %v77, 6
    %v132 = vperm.slane %v78, 0
    %v133 = vperm.slane %v78, 2
    %v134 = vperm.slane %v78, 4
    %v135 = vperm.slane %v78, 6
    %v136 = vperm.slane %v79, 0
    %v137 = vperm.slane %v79, 2
    %v138 = vperm.slane %v79, 4
    %v139 = vperm.slane %v79, 6
    %v188 = vperm.slane %v92, 0
    %v189 = vperm.slane %v93, 0
    %v190 = vperm.slane %v94, 0
    %v191 = vperm.slane %v95, 0
    %v192 = vperm.slane %v96, 0
    %v193 = vperm.slane %v97, 0
    %v194 = vperm.slane %v98, 0
    %v195 = vperm.slane %v99, 0
    %v196 = vperm.slane %v100, 0
    %v197 = vperm.slane %v101, 0
    %v198 = vperm.slane %v102, 0
    %v199 = vperm.slane %v103, 0
    %v200 = vperm.slane %v104, 0
    %v201 = vperm.slane %v105, 0
    %v202 = vperm.slane %v106, 0
    %v203 = vperm.slane %v107, 0
    %v204 = vperm.slane %v108, 0
    %v205 = vperm.slane %v109, 0
    %v206 = vperm.slane %v110, 0
    %v207 = vperm.slane %v111, 0
    %v208 = vperm.slane %v112, 0
    %v209 = vperm.slane %v113, 0
    %v210 = vperm.slane %v114, 0
    %v211 = vperm.slane %v115, 0
    %v212 = vperm.slane %v116, 0
    %v213 = vperm.slane %v117, 0
    %v214 = vperm.slane %v118, 0
    %v215 = vperm.slane %v119, 0
    %v216 = vperm.slane %v120, 0
    %v217 = vperm.slane %v121, 0
    %v218 = vperm.slane %v122, 0
    %v219 = vperm.slane %v123, 0
    %v220 = vperm.slane %v124, 0
    %v221 = vperm.slane %v125, 0
    %v222 = vperm.slane %v126, 0
    %v223 = vperm.slane %v127, 0
    %v224 = vperm.slane %v128, 0
    %v225 = vperm.slane %v129, 0
    %v226 = vperm.slane %v130, 0
    %v227 = vperm.slane %v131, 0
    %v228 = vperm.slane %v132, 0
    %v229 = vperm.slane %v133, 0
    %v230 = vperm.slane %v134, 0
    %v231 = vperm.slane %v135, 0
    %v232 = vperm.slane %v136, 0
    %v233 = vperm.slane %v137, 0
    %v234 = vperm.slane %v138, 0
    %v235 = vperm.slane %v139, 0
    %v284 = vrot.slane %v189, 6
    %v285 = vrot.slane %v190, 4
    %v286 = vrot.slane %v191, 2
    %v287 = vrot.slane %v193, 6
    %v288 = vrot.slane %v194, 4
    %v289 = vrot.slane %v195, 2
    %v290 = vrot.slane %v197, 6
    %v291 = vrot.slane %v198, 4
    %v292 = vrot.slane %v199, 2
    %v293 = vrot.slane %v201, 6
    %v294 = vrot.slane %v202, 4
    %v295 = vrot.slane %v203, 2
    %v296 = vrot.slane %v205, 6
    %v297 = vrot.slane %v206, 4
    %v298 = vrot.slane %v207, 2
    %v299 = vrot.slane %v209, 6
    %v300 = vrot.slane %v210, 4
    %v301 = vrot.slane %v211, 2
    %v302 = vrot.slane %v213, 6
    %v303 = vrot.slane %v214, 4
    %v304 = vrot.slane %v215, 2
    %v305 = vrot.slane %v217, 6
    %v306 = vrot.slane %v218, 4
    %v307 = vrot.slane %v219, 2
    %v308 = vrot.slane %v221, 6
    %v309 = vrot.slane %v222, 4
    %v310 = vrot.slane %v223, 2
    %v311 = vrot.slane %v225, 6
    %v312 = vrot.slane %v226, 4
    %v313 = vrot.slane %v227, 2
    %v314 = vrot.slane %v229, 6
    %v315 = vrot.slane %v230, 4
    %v316 = vrot.slane %v231, 2
    %v317 = vrot.slane %v233, 6
    %v318 = vrot.slane %v234, 4
    %v319 = vrot.slane %v235, 2
    %vm320 = vcmask 1041408
    %v321 = vsel %vm320, %v188, %v284
    %vm322 = vcmask 1045508
    %v323 = vsel %vm322, %v285, %v286
    %vm324 = vcmask 1043456
    %v325 = vsel %vm324, %v321, %v323
    %v326 = vsel %vm320, %v192, %v287
    %v327 = vsel %vm322, %v288, %v289
    %v328 = vsel %vm324, %v326, %v327
    %v329 = vsel %vm320, %v196, %v290
    %v330 = vsel %vm322, %v291, %v292
    %v331 = vsel %vm324, %v329, %v330
    %v332 = vsel %vm320, %v200, %v293
    %v333 = vsel %vm322, %v294, %v295
    %v334 = vsel %vm324, %v332, %v333
    %v335 = vsel %vm320, %v204, %v296
    %v336 = vsel %vm322, %v297, %v298
    %v337 = vsel %vm324, %v335, %v336
    %v338 = vsel %vm320, %v208, %v299
    %v339 = vsel %vm322, %v300, %v301
    %v340 = vsel %vm324, %v338, %v339
    %v341 = vsel %vm320, %v212, %v302
    %v342 = vsel %vm322, %v303, %v304
    %v343 = vsel %vm324, %v341, %v342
    %v344 = vsel %vm320, %v216, %v305
    %v345 = vsel %vm322, %v306, %v307
    %v346 = vsel %vm324, %v344, %v345
    %v347 = vsel %vm320, %v220, %v308
    %v348 = vsel %vm322, %v309, %v310
    %v349 = vsel %vm324, %v347, %v348
    %v350 = vsel %vm320, %v224, %v311
    %v351 = vsel %vm322, %v312, %v313
    %v352 = vsel %vm324, %v350, %v351
    %v353 = vsel %vm320, %v228, %v314
    %v354 = vsel %vm322, %v315, %v316
    %v355 = vsel %vm324, %v353, %v354
    %v356 = vsel %vm320, %v232, %v317
    %v357 = vsel %vm322, %v318, %v319
    %v358 = vsel %vm324, %v356, %v357
    %v371 = vmul.f32 %v56, %v325
    %v372 = vmul.f32 %v57, %v328
    %v373 = vmul.f32 %v58, %v331
    %v374 = vmul.f32 %v59, %v334
    %v375 = vmul.f32 %v60, %v337
    %v376 = vmul.f32 %v61, %v340
    %v377 = vmul.f32 %v62, %v343
    %v378 = vmul.f32 %v63, %v346
    %v379 = vmul.f32 %v64, %v349
    %v380 = vmul.f32 %v65, %v352
    %v381 = vmul.f32 %v66, %v355
    %v382 = vmul.f32 %v67, %v358
    %395 = vst [vmem:[#allocation1] ss:$4 sm:$0xff] %v371
    %s396 = scalar_lea.vmem [#allocation1], 32
    %397 = vst [vmem:[%s396] ss:$4 sm:$0xff] %v372
    %v398 = vld.sshfl [vmem:[#allocation1] sm:$0xff pattern:$0x73625140]
    %v399 = vld.sshfl [vmem:[#allocation1 + $0x8] sm:$0xff pattern:$0x73625140]
    %v400 = vld.sshfl [vmem:[#allocation1 + $0x10] sm:$0xff pattern:$0x73625140]
    %v401 = vld.sshfl [vmem:[#allocation1 + $0x18] sm:$0xff pattern:$0x73625140]
    %v402 = vld.sshfl [vmem:[#allocation1 + $0x20] sm:$0xff pattern:$0x73625140]
    %v403 = vld.sshfl [vmem:[#allocation1 + $0x28] sm:$0xff pattern:$0x73625140]
    %v404 = vld.sshfl [vmem:[#allocation1 + $0x30] sm:$0xff pattern:$0x73625140]
    %v405 = vld.sshfl [vmem:[#allocation1 + $0x38] sm:$0xff pattern:$0x73625140]
    %406 = vst [vmem:[#allocation1] ss:$4 sm:$0xff] %v373
    %407 = vst [vmem:[%s396] ss:$4 sm:$0xff] %v374
    %v408 = vld.sshfl [vmem:[#allocation1] sm:$0xff pattern:$0x73625140]
    %v409 = vld.sshfl [vmem:[#allocation1 + $0x8] sm:$0xff pattern:$0x73625140]
    %v410 = vld.sshfl [vmem:[#allocation1 + $0x10] sm:$0xff pattern:$0x73625140]
    %v411 = vld.sshfl [vmem:[#allocation1 + $0x18] sm:$0xff pattern:$0x73625140]
    %v412 = vld.sshfl [vmem:[#allocation1 + $0x20] sm:$0xff pattern:$0x73625140]
    %v413 = vld.sshfl [vmem:[#allocation1 + $0x28] sm:$0xff pattern:$0x73625140]
    %v414 = vld.sshfl [vmem:[#allocation1 + $0x30] sm:$0xff pattern:$0x73625140]
    %v415 = vld.sshfl [vmem:[#allocation1 + $0x38] sm:$0xff pattern:$0x73625140]
    %416 = vst [vmem:[#allocation1] ss:$4 sm:$0xff] %v375
    %417 = vst [vmem:[%s396] ss:$4 sm:$0xff] %v376
    %v418 = vld.sshfl [vmem:[#allocation1] sm:$0xff pattern:$0x73625140]
    %v419 = vld.sshfl [vmem:[#allocation1 + $0x8] sm:$0xff pattern:$0x73625140]
    %v420 = vld.sshfl [vmem:[#allocation1 + $0x10] sm:$0xff pattern:$0x73625140]
    %v421 = vld.sshfl [vmem:[#allocation1 + $0x18] sm:$0xff pattern:$0x73625140]
    %v422 = vld.sshfl [vmem:[#allocation1 + $0x20] sm:$0xff pattern:$0x73625140]
    %v423 = vld.sshfl [vmem:[#allocation1 + $0x28] sm:$0xff pattern:$0x73625140]
    %v424 = vld.sshfl [vmem:[#allocation1 + $0x30] sm:$0xff pattern:$0x73625140]
    %v425 = vld.sshfl [vmem:[#allocation1 + $0x38] sm:$0xff pattern:$0x73625140]
    %426 = vst [vmem:[#allocation1] ss:$4 sm:$0xff] %v377
    %427 = vst [vmem:[%s396] ss:$4 sm:$0xff] %v378
    %v428 = vld.sshfl [vmem:[#allocation1] sm:$0xff pattern:$0x73625140]
    %v429 = vld.sshfl [vmem:[#allocation1 + $0x8] sm:$0xff pattern:$0x73625140]
    %v430 = vld.sshfl [vmem:[#allocation1 + $0x10] sm:$0xff pattern:$0x73625140]
    %v431 = vld.sshfl [vmem:[#allocation1 + $0x18] sm:$0xff pattern:$0x73625140]
    %v432 = vld.sshfl [vmem:[#allocation1 + $0x20] sm:$0xff pattern:$0x73625140]
    %v433 = vld.sshfl [vmem:[#allocation1 + $0x28] sm:$0xff pattern:$0x73625140]
    %v434 = vld.sshfl [vmem:[#allocation1 + $0x30] sm:$0xff pattern:$0x73625140]
    %v435 = vld.sshfl [vmem:[#allocation1 + $0x38] sm:$0xff pattern:$0x73625140]
    %436 = vst [vmem:[#allocation1] ss:$4 sm:$0xff] %v379
    %437 = vst [vmem:[%s396] ss:$4 sm:$0xff] %v380
    %v438 = vld.sshfl [vmem:[#allocation1] sm:$0xff pattern:$0x73625140]
    %v439 = vld.sshfl [vmem:[#allocation1 + $0x8] sm:$0xff pattern:$0x73625140]
    %v440 = vld.sshfl [vmem:[#allocation1 + $0x10] sm:$0xff pattern:$0x73625140]
    %v441 = vld.sshfl [vmem:[#allocation1 + $0x18] sm:$0xff pattern:$0x73625140]
    %v442 = vld.sshfl [vmem:[#allocation1 + $0x20] sm:$0xff pattern:$0x73625140]
    %v443 = vld.sshfl [vmem:[#allocation1 + $0x28] sm:$0xff pattern:$0x73625140]
    %v444 = vld.sshfl [vmem:[#allocation1 + $0x30] sm:$0xff pattern:$0x73625140]
    %v445 = vld.sshfl [vmem:[#allocation1 + $0x38] sm:$0xff pattern:$0x73625140]
    %446 = vst [vmem:[#allocation1] ss:$4 sm:$0xff] %v381
    %447 = vst [vmem:[%s396] ss:$4 sm:$0xff] %v382
    %v448 = vld.sshfl [vmem:[#allocation1] sm:$0xff pattern:$0x73625140]
    %v449 = vld.sshfl [vmem:[#allocation1 + $0x8] sm:$0xff pattern:$0x73625140]
    %v450 = vld.sshfl [vmem:[#allocation1 + $0x10] sm:$0xff pattern:$0x73625140]
    %v451 = vld.sshfl [vmem:[#allocation1 + $0x18] sm:$0xff pattern:$0x73625140]
    %v452 = vld.sshfl [vmem:[#allocation1 + $0x20] sm:$0xff pattern:$0x73625140]
    %v453 = vld.sshfl [vmem:[#allocation1 + $0x28] sm:$0xff pattern:$0x73625140]
    %v454 = vld.sshfl [vmem:[#allocation1 + $0x30] sm:$0xff pattern:$0x73625140]
    %v455 = vld.sshfl [vmem:[#allocation1 + $0x38] sm:$0xff pattern:$0x73625140]
    %v504 = vsel %vm320, %v398, 0.0
    %v505 = vsel %vm320, %v399, 0.0
    %v506 = vadd.f32 %v504, %v505
    %v507 = vsel %vm320, %v400, 0.0
    %v508 = vadd.f32 %v506, %v507
    %v509 = vsel %vm320, %v401, 0.0
    %v510 = vadd.f32 %v508, %v509
    %v511 = vsel %vm320, %v402, 0.0
    %v512 = vadd.f32 %v510, %v511
    %v513 = vsel %vm320, %v403, 0.0
    %v514 = vadd.f32 %v512, %v513
    %v515 = vsel %vm320, %v404, 0.0
    %v516 = vadd.f32 %v514, %v515
    %v517 = vsel %vm320, %v405, 0.0
    %v518 = vadd.f32 %v516, %v517
    %v519 = vsel %vm320, %v408, 0.0
    %v520 = vadd.f32 %v518, %v519
    %v521 = vsel %vm320, %v409, 0.0
    %v522 = vadd.f32 %v520, %v521
    %v523 = vsel %vm320, %v410, 0.0
    %v524 = vadd.f32 %v522, %v523
    %v525 = vsel %vm320, %v411, 0.0
    %v526 = vadd.f32 %v524, %v525
    %v527 = vsel %vm320, %v412, 0.0
    %v528 = vadd.f32 %v526, %v527
    %v529 = vsel %vm320, %v413, 0.0
    %v530 = vadd.f32 %v528, %v529
    %v531 = vsel %vm320, %v414, 0.0
    %v532 = vadd.f32 %v530, %v531
    %v533 = vsel %vm320, %v415, 0.0
    %v534 = vadd.f32 %v532, %v533
    %v535 = vsel %vm320, %v418, 0.0
    %v536 = vadd.f32 %v534, %v535
    %v537 = vsel %vm320, %v419, 0.0
    %v538 = vadd.f32 %v536, %v537
    %v539 = vsel %vm320, %v420, 0.0
    %v540 = vadd.f32 %v538, %v539
    %v541 = vsel %vm320, %v421, 0.0
    %v542 = vadd.f32 %v540, %v541
    %v543 = vsel %vm320, %v422, 0.0
    %v544 = vadd.f32 %v542, %v543
    %v545 = vsel %vm320, %v423, 0.0
    %v546 = vadd.f32 %v544, %v545
    %v547 = vsel %vm320, %v424, 0.0
    %v548 = vadd.f32 %v546, %v547
    %v549 = vsel %vm320, %v425, 0.0
    %v550 = vadd.f32 %v548, %v549
    %v551 = vsel %vm320, %v428, 0.0
    %v552 = vadd.f32 %v550, %v551
    %v553 = vsel %vm320, %v429, 0.0
    %v554 = vadd.f32 %v552, %v553
    %v555 = vsel %vm320, %v430, 0.0
    %v556 = vadd.f32 %v554, %v555
    %v557 = vsel %vm320, %v431, 0.0
    %v558 = vadd.f32 %v556, %v557
    %v559 = vsel %vm320, %v432, 0.0
    %v560 = vadd.f32 %v558, %v559
    %v561 = vsel %vm320, %v433, 0.0
    %v562 = vadd.f32 %v560, %v561
    %v563 = vsel %vm320, %v434, 0.0
    %v564 = vadd.f32 %v562, %v563
    %v565 = vsel %vm320, %v435, 0.0
    %v566 = vadd.f32 %v564, %v565
    %v567 = vsel %vm320, %v438, 0.0
    %v568 = vadd.f32 %v566, %v567
    %v569 = vsel %vm320, %v439, 0.0
    %v570 = vadd.f32 %v568, %v569
    %v571 = vsel %vm320, %v440, 0.0
    %v572 = vadd.f32 %v570, %v571
    %v573 = vsel %vm320, %v441, 0.0
    %v574 = vadd.f32 %v572, %v573
    %v575 = vsel %vm320, %v442, 0.0
    %v576 = vadd.f32 %v574, %v575
    %v577 = vsel %vm320, %v443, 0.0
    %v578 = vadd.f32 %v576, %v577
    %v579 = vsel %vm320, %v444, 0.0
    %v580 = vadd.f32 %v578, %v579
    %v581 = vsel %vm320, %v445, 0.0
    %v582 = vadd.f32 %v580, %v581
    %v583 = vsel %vm320, %v448, 0.0
    %v584 = vadd.f32 %v582, %v583
    %v585 = vsel %vm320, %v449, 0.0
    %v586 = vadd.f32 %v584, %v585
    %v587 = vsel %vm320, %v450, 0.0
    %v588 = vadd.f32 %v586, %v587
    %v589 = vsel %vm320, %v451, 0.0
    %v590 = vadd.f32 %v588, %v589
    %v591 = vsel %vm320, %v452, 0.0
    %v592 = vadd.f32 %v590, %v591
    %v593 = vsel %vm320, %v453, 0.0
    %v594 = vadd.f32 %v592, %v593
    %v595 = vsel %vm320, %v454, 0.0
    %v596 = vadd.f32 %v594, %v595
    %v597 = vsel %vm320, %v455, 0.0
    %v598 = vadd.f32 %v596, %v597
    %599 = vadd.xlane.f32.xlu0 %v598
    %v600 = vpop.xlane.xlu0 %599
    %s601 = sld [smem:[#allocation8]]
    %v602 = vstv %s601
    %v603 = vadd.f32 %v600, %v602
    %v604 = vperm.slane %v68, 1
    %v605 = vperm.slane %v68, 3
    %v606 = vperm.slane %v68, 5
    %v607 = vperm.slane %v68, 7
    %v608 = vperm.slane %v69, 1
    %v609 = vperm.slane %v69, 3
    %v610 = vperm.slane %v69, 5
    %v611 = vperm.slane %v69, 7
    %v612 = vperm.slane %v70, 1
    %v613 = vperm.slane %v70, 3
    %v614 = vperm.slane %v70, 5
    %v615 = vperm.slane %v70, 7
    %v616 = vperm.slane %v71, 1
    %v617 = vperm.slane %v71, 3
    %v618 = vperm.slane %v71, 5
    %v619 = vperm.slane %v71, 7
    %v620 = vperm.slane %v72, 1
    %v621 = vperm.slane %v72, 3
    %v622 = vperm.slane %v72, 5
    %v623 = vperm.slane %v72, 7
    %v624 = vperm.slane %v73, 1
    %v625 = vperm.slane %v73, 3
    %v626 = vperm.slane %v73, 5
    %v627 = vperm.slane %v73, 7
    %v628 = vperm.slane %v74, 1
    %v629 = vperm.slane %v74, 3
    %v630 = vperm.slane %v74, 5
    %v631 = vperm.slane %v74, 7
    %v632 = vperm.slane %v75, 1
    %v633 = vperm.slane %v75, 3
    %v634 = vperm.slane %v75, 5
    %v635 = vperm.slane %v75, 7
    %v636 = vperm.slane %v76, 1
    %v637 = vperm.slane %v76, 3
    %v638 = vperm.slane %v76, 5
    %v639 = vperm.slane %v76, 7
    %v640 = vperm.slane %v77, 1
    %v641 = vperm.slane %v77, 3
    %v642 = vperm.slane %v77, 5
    %v643 = vperm.slane %v77, 7
    %v644 = vperm.slane %v78, 1
    %v645 = vperm.slane %v78, 3
    %v646 = vperm.slane %v78, 5
    %v647 = vperm.slane %v78, 7
    %v648 = vperm.slane %v79, 1
    %v649 = vperm.slane %v79, 3
    %v650 = vperm.slane %v79, 5
    %v651 = vperm.slane %v79, 7
    %v700 = vperm.slane %v604, 1
    %v701 = vperm.slane %v605, 1
    %v702 = vperm.slane %v606, 1
    %v703 = vperm.slane %v607, 1
    %v704 = vperm.slane %v608, 1
    %v705 = vperm.slane %v609, 1
    %v706 = vperm.slane %v610, 1
    %v707 = vperm.slane %v611, 1
    %v708 = vperm.slane %v612, 1
    %v709 = vperm.slane %v613, 1
    %v710 = vperm.slane %v614, 1
    %v711 = vperm.slane %v615, 1
    %v712 = vperm.slane %v616, 1
    %v713 = vperm.slane %v617, 1
    %v714 = vperm.slane %v618, 1
    %v715 = vperm.slane %v619, 1
    %v716 = vperm.slane %v620, 1
    %v717 = vperm.slane %v621, 1
    %v718 = vperm.slane %v622, 1
    %v719 = vperm.slane %v623, 1
    %v720 = vperm.slane %v624, 1
    %v721 = vperm.slane %v625, 1
    %v722 = vperm.slane %v626, 1
    %v723 = vperm.slane %v627, 1
    %v724 = vperm.slane %v628, 1
    %v725 = vperm.slane %v629, 1
    %v726 = vperm.slane %v630, 1
    %v727 = vperm.slane %v631, 1
    %v728 = vperm.slane %v632, 1
    %v729 = vperm.slane %v633, 1
    %v730 = vperm.slane %v634, 1
    %v731 = vperm.slane %v635, 1
    %v732 = vperm.slane %v636, 1
    %v733 = vperm.slane %v637, 1
    %v734 = vperm.slane %v638, 1
    %v735 = vperm.slane %v639, 1
    %v736 = vperm.slane %v640, 1
    %v737 = vperm.slane %v641, 1
    %v738 = vperm.slane %v642, 1
    %v739 = vperm.slane %v643, 1
    %v740 = vperm.slane %v644, 1
    %v741 = vperm.slane %v645, 1
    %v742 = vperm.slane %v646, 1
    %v743 = vperm.slane %v647, 1
    %v744 = vperm.slane %v648, 1
    %v745 = vperm.slane %v649, 1
    %v746 = vperm.slane %v650, 1
    %v747 = vperm.slane %v651, 1
    %v796 = vrot.slane %v701, 6
    %v797 = vrot.slane %v702, 4
    %v798 = vrot.slane %v703, 2
    %v799 = vrot.slane %v705, 6
    %v800 = vrot.slane %v706, 4
    %v801 = vrot.slane %v707, 2
    %v802 = vrot.slane %v709, 6
    %v803 = vrot.slane %v710, 4
    %v804 = vrot.slane %v711, 2
    %v805 = vrot.slane %v713, 6
    %v806 = vrot.slane %v714, 4
    %v807 = vrot.slane %v715, 2
    %v808 = vrot.slane %v717, 6
    %v809 = vrot.slane %v718, 4
    %v810 = vrot.slane %v719, 2
    %v811 = vrot.slane %v721, 6
    %v812 = vrot.slane %v722, 4
    %v813 = vrot.slane %v723, 2
    %v814 = vrot.slane %v725, 6
    %v815 = vrot.slane %v726, 4
    %v816 = vrot.slane %v727, 2
    %v817 = vrot.slane %v729, 6
    %v818 = vrot.slane %v730, 4
    %v819 = vrot.slane %v731, 2
    %v820 = vrot.slane %v733, 6
    %v821 = vrot.slane %v734, 4
    %v822 = vrot.slane %v735, 2
    %v823 = vrot.slane %v737, 6
    %v824 = vrot.slane %v738, 4
    %v825 = vrot.slane %v739, 2
    %v826 = vrot.slane %v741, 6
    %v827 = vrot.slane %v742, 4
    %v828 = vrot.slane %v743, 2
    %v829 = vrot.slane %v745, 6
    %v830 = vrot.slane %v746, 4
    %v831 = vrot.slane %v747, 2
    %v832 = vsel %vm320, %v700, %v796
    %v833 = vsel %vm322, %v797, %v798
    %v834 = vsel %vm324, %v832, %v833
    %v835 = vsel %vm320, %v704, %v799
    %v836 = vsel %vm322, %v800, %v801
    %v837 = vsel %vm324, %v835, %v836
    %v838 = vsel %vm320, %v708, %v802
    %v839 = vsel %vm322, %v803, %v804
    %v840 = vsel %vm324, %v838, %v839
    %v841 = vsel %vm320, %v712, %v805
    %v842 = vsel %vm322, %v806, %v807
    %v843 = vsel %vm324, %v841, %v842
    %v844 = vsel %vm320, %v716, %v808
    %v845 = vsel %vm322, %v809, %v810
    %v846 = vsel %vm324, %v844, %v845
    %v847 = vsel %vm320, %v720, %v811
    %v848 = vsel %vm322, %v812, %v813
    %v849 = vsel %vm324, %v847, %v848
    %v850 = vsel %vm320, %v724, %v814
    %v851 = vsel %vm322, %v815, %v816
    %v852 = vsel %vm324, %v850, %v851
    %v853 = vsel %vm320, %v728, %v817
    %v854 = vsel %vm322, %v818, %v819
    %v855 = vsel %vm324, %v853, %v854
    %v856 = vsel %vm320, %v732, %v820
    %v857 = vsel %vm322, %v821, %v822
    %v858 = vsel %vm324, %v856, %v857
    %v859 = vsel %vm320, %v736, %v823
    %v860 = vsel %vm322, %v824, %v825
    %v861 = vsel %vm324, %v859, %v860
    %v862 = vsel %vm320, %v740, %v826
    %v863 = vsel %vm322, %v827, %v828
    %v864 = vsel %vm324, %v862, %v863
    %v865 = vsel %vm320, %v744, %v829
    %v866 = vsel %vm322, %v830, %v831
    %v867 = vsel %vm324, %v865, %v866
    %v880 = vmul.f32 %v56, %v834
    %v881 = vmul.f32 %v57, %v837
    %v882 = vmul.f32 %v58, %v840
    %v883 = vmul.f32 %v59, %v843
    %v884 = vmul.f32 %v60, %v846
    %v885 = vmul.f32 %v61, %v849
    %v886 = vmul.f32 %v62, %v852
    %v887 = vmul.f32 %v63, %v855
    %v888 = vmul.f32 %v64, %v858
    %v889 = vmul.f32 %v65, %v861
    %v890 = vmul.f32 %v66, %v864
    %v891 = vmul.f32 %v67, %v867
    %904 = vst [vmem:[#allocation1] ss:$4 sm:$0xff] %v880
    %s905 = scalar_lea.vmem [#allocation1], 32
    %906 = vst [vmem:[%s905] ss:$4 sm:$0xff] %v881
    %v907 = vld.sshfl [vmem:[#allocation1] sm:$0xff pattern:$0x73625140]
    %v908 = vld.sshfl [vmem:[#allocation1 + $0x8] sm:$0xff pattern:$0x73625140]
    %v909 = vld.sshfl [vmem:[#allocation1 + $0x10] sm:$0xff pattern:$0x73625140]
    %v910 = vld.sshfl [vmem:[#allocation1 + $0x18] sm:$0xff pattern:$0x73625140]
    %v911 = vld.sshfl [vmem:[#allocation1 + $0x20] sm:$0xff pattern:$0x73625140]
    %v912 = vld.sshfl [vmem:[#allocation1 + $0x28] sm:$0xff pattern:$0x73625140]
    %v913 = vld.sshfl [vmem:[#allocation1 + $0x30] sm:$0xff pattern:$0x73625140]
    %v914 = vld.sshfl [vmem:[#allocation1 + $0x38] sm:$0xff pattern:$0x73625140]
    %915 = vst [vmem:[#allocation1] ss:$4 sm:$0xff] %v882
    %916 = vst [vmem:[%s905] ss:$4 sm:$0xff] %v883
    %v917 = vld.sshfl [vmem:[#allocation1] sm:$0xff pattern:$0x73625140]
    %v918 = vld.sshfl [vmem:[#allocation1 + $0x8] sm:$0xff pattern:$0x73625140]
    %v919 = vld.sshfl [vmem:[#allocation1 + $0x10] sm:$0xff pattern:$0x73625140]
    %v920 = vld.sshfl [vmem:[#allocation1 + $0x18] sm:$0xff pattern:$0x73625140]
    %v921 = vld.sshfl [vmem:[#allocation1 + $0x20] sm:$0xff pattern:$0x73625140]
    %v922 = vld.sshfl [vmem:[#allocation1 + $0x28] sm:$0xff pattern:$0x73625140]
    %v923 = vld.sshfl [vmem:[#allocation1 + $0x30] sm:$0xff pattern:$0x73625140]
    %v924 = vld.sshfl [vmem:[#allocation1 + $0x38] sm:$0xff pattern:$0x73625140]
    %925 = vst [vmem:[#allocation1] ss:$4 sm:$0xff] %v884
    %926 = vst [vmem:[%s905] ss:$4 sm:$0xff] %v885
    %v927 = vld.sshfl [vmem:[#allocation1] sm:$0xff pattern:$0x73625140]
    %v928 = vld.sshfl [vmem:[#allocation1 + $0x8] sm:$0xff pattern:$0x73625140]
    %v929 = vld.sshfl [vmem:[#allocation1 + $0x10] sm:$0xff pattern:$0x73625140]
    %v930 = vld.sshfl [vmem:[#allocation1 + $0x18] sm:$0xff pattern:$0x73625140]
    %v931 = vld.sshfl [vmem:[#allocation1 + $0x20] sm:$0xff pattern:$0x73625140]
    %v932 = vld.sshfl [vmem:[#allocation1 + $0x28] sm:$0xff pattern:$0x73625140]
    %v933 = vld.sshfl [vmem:[#allocation1 + $0x30] sm:$0xff pattern:$0x73625140]
    %v934 = vld.sshfl [vmem:[#allocation1 + $0x38] sm:$0xff pattern:$0x73625140]
    %935 = vst [vmem:[#allocation1] ss:$4 sm:$0xff] %v886
    %936 = vst [vmem:[%s905] ss:$4 sm:$0xff] %v887
    %v937 = vld.sshfl [vmem:[#allocation1] sm:$0xff pattern:$0x73625140]
    %v938 = vld.sshfl [vmem:[#allocation1 + $0x8] sm:$0xff pattern:$0x73625140]
    %v939 = vld.sshfl [vmem:[#allocation1 + $0x10] sm:$0xff pattern:$0x73625140]
    %v940 = vld.sshfl [vmem:[#allocation1 + $0x18] sm:$0xff pattern:$0x73625140]
    %v941 = vld.sshfl [vmem:[#allocation1 + $0x20] sm:$0xff pattern:$0x73625140]
    %v942 = vld.sshfl [vmem:[#allocation1 + $0x28] sm:$0xff pattern:$0x73625140]
    %v943 = vld.sshfl [vmem:[#allocation1 + $0x30] sm:$0xff pattern:$0x73625140]
    %v944 = vld.sshfl [vmem:[#allocation1 + $0x38] sm:$0xff pattern:$0x73625140]
    %945 = vst [vmem:[#allocation1] ss:$4 sm:$0xff] %v888
    %946 = vst [vmem:[%s905] ss:$4 sm:$0xff] %v889
    %v947 = vld.sshfl [vmem:[#allocation1] sm:$0xff pattern:$0x73625140]
    %v948 = vld.sshfl [vmem:[#allocation1 + $0x8] sm:$0xff pattern:$0x73625140]
    %v949 = vld.sshfl [vmem:[#allocation1 + $0x10] sm:$0xff pattern:$0x73625140]
    %v950 = vld.sshfl [vmem:[#allocation1 + $0x18] sm:$0xff pattern:$0x73625140]
    %v951 = vld.sshfl [vmem:[#allocation1 + $0x20] sm:$0xff pattern:$0x73625140]
    %v952 = vld.sshfl [vmem:[#allocation1 + $0x28] sm:$0xff pattern:$0x73625140]
    %v953 = vld.sshfl [vmem:[#allocation1 + $0x30] sm:$0xff pattern:$0x73625140]
    %v954 = vld.sshfl [vmem:[#allocation1 + $0x38] sm:$0xff pattern:$0x73625140]
    %955 = vst [vmem:[#allocation1] ss:$4 sm:$0xff] %v890
    %956 = vst [vmem:[%s905] ss:$4 sm:$0xff] %v891
    %v957 = vld.sshfl [vmem:[#allocation1] sm:$0xff pattern:$0x73625140]
    %v958 = vld.sshfl [vmem:[#allocation1 + $0x8] sm:$0xff pattern:$0x73625140]
    %v959 = vld.sshfl [vmem:[#allocation1 + $0x10] sm:$0xff pattern:$0x73625140]
    %v960 = vld.sshfl [vmem:[#allocation1 + $0x18] sm:$0xff pattern:$0x73625140]
    %v961 = vld.sshfl [vmem:[#allocation1 + $0x20] sm:$0xff pattern:$0x73625140]
    %v962 = vld.sshfl [vmem:[#allocation1 + $0x28] sm:$0xff pattern:$0x73625140]
    %v963 = vld.sshfl [vmem:[#allocation1 + $0x30] sm:$0xff pattern:$0x73625140]
    %v964 = vld.sshfl [vmem:[#allocation1 + $0x38] sm:$0xff pattern:$0x73625140]
    %v1013 = vsel %vm320, %v907, 0.0
    %v1014 = vsel %vm320, %v908, 0.0
    %v1015 = vadd.f32 %v1013, %v1014
    %v1016 = vsel %vm320, %v909, 0.0
    %v1017 = vadd.f32 %v1015, %v1016
    %v1018 = vsel %vm320, %v910, 0.0
    %v1019 = vadd.f32 %v1017, %v1018
    %v1020 = vsel %vm320, %v911, 0.0
    %v1021 = vadd.f32 %v1019, %v1020
    %v1022 = vsel %vm320, %v912, 0.0
    %v1023 = vadd.f32 %v1021, %v1022
    %v1024 = vsel %vm320, %v913, 0.0
    %v1025 = vadd.f32 %v1023, %v1024
    %v1026 = vsel %vm320, %v914, 0.0
    %v1027 = vadd.f32 %v1025, %v1026
    %v1028 = vsel %vm320, %v917, 0.0
    %v1029 = vadd.f32 %v1027, %v1028
    %v1030 = vsel %vm320, %v918, 0.0
    %v1031 = vadd.f32 %v1029, %v1030
    %v1032 = vsel %vm320, %v919, 0.0
    %v1033 = vadd.f32 %v1031, %v1032
    %v1034 = vsel %vm320, %v920, 0.0
    %v1035 = vadd.f32 %v1033, %v1034
    %v1036 = vsel %vm320, %v921, 0.0
    %v1037 = vadd.f32 %v1035, %v1036
    %v1038 = vsel %vm320, %v922, 0.0
    %v1039 = vadd.f32 %v1037, %v1038
    %v1040 = vsel %vm320, %v923, 0.0
    %v1041 = vadd.f32 %v1039, %v1040
    %v1042 = vsel %vm320, %v924, 0.0
    %v1043 = vadd.f32 %v1041, %v1042
    %v1044 = vsel %vm320, %v927, 0.0
    %v1045 = vadd.f32 %v1043, %v1044
    %v1046 = vsel %vm320, %v928, 0.0
    %v1047 = vadd.f32 %v1045, %v1046
    %v1048 = vsel %vm320, %v929, 0.0
    %v1049 = vadd.f32 %v1047, %v1048
    %v1050 = vsel %vm320, %v930, 0.0
    %v1051 = vadd.f32 %v1049, %v1050
    %v1052 = vsel %vm320, %v931, 0.0
    %v1053 = vadd.f32 %v1051, %v1052
    %v1054 = vsel %vm320, %v932, 0.0
    %v1055 = vadd.f32 %v1053, %v1054
    %v1056 = vsel %vm320, %v933, 0.0
    %v1057 = vadd.f32 %v1055, %v1056
    %v1058 = vsel %vm320, %v934, 0.0
    %v1059 = vadd.f32 %v1057, %v1058
    %v1060 = vsel %vm320, %v937, 0.0
    %v1061 = vadd.f32 %v1059, %v1060
    %v1062 = vsel %vm320, %v938, 0.0
    %v1063 = vadd.f32 %v1061, %v1062
    %v1064 = vsel %vm320, %v939, 0.0
    %v1065 = vadd.f32 %v1063, %v1064
    %v1066 = vsel %vm320, %v940, 0.0
    %v1067 = vadd.f32 %v1065, %v1066
    %v1068 = vsel %vm320, %v941, 0.0
    %v1069 = vadd.f32 %v1067, %v1068
    %v1070 = vsel %vm320, %v942, 0.0
    %v1071 = vadd.f32 %v1069, %v1070
    %v1072 = vsel %vm320, %v943, 0.0
    %v1073 = vadd.f32 %v1071, %v1072
    %v1074 = vsel %vm320, %v944, 0.0
    %v1075 = vadd.f32 %v1073, %v1074
    %v1076 = vsel %vm320, %v947, 0.0
    %v1077 = vadd.f32 %v1075, %v1076
    %v1078 = vsel %vm320, %v948, 0.0
    %v1079 = vadd.f32 %v1077, %v1078
    %v1080 = vsel %vm320, %v949, 0.0
    %v1081 = vadd.f32 %v1079, %v1080
    %v1082 = vsel %vm320, %v950, 0.0
    %v1083 = vadd.f32 %v1081, %v1082
    %v1084 = vsel %vm320, %v951, 0.0
    %v1085 = vadd.f32 %v1083, %v1084
    %v1086 = vsel %vm320, %v952, 0.0
    %v1087 = vadd.f32 %v1085, %v1086
    %v1088 = vsel %vm320, %v953, 0.0
    %v1089 = vadd.f32 %v1087, %v1088
    %v1090 = vsel %vm320, %v954, 0.0
    %v1091 = vadd.f32 %v1089, %v1090
    %v1092 = vsel %vm320, %v957, 0.0
    %v1093 = vadd.f32 %v1091, %v1092
    %v1094 = vsel %vm320, %v958, 0.0
    %v1095 = vadd.f32 %v1093, %v1094
    %v1096 = vsel %vm320, %v959, 0.0
    %v1097 = vadd.f32 %v1095, %v1096
    %v1098 = vsel %vm320, %v960, 0.0
    %v1099 = vadd.f32 %v1097, %v1098
    %v1100 = vsel %vm320, %v961, 0.0
    %v1101 = vadd.f32 %v1099, %v1100
    %v1102 = vsel %vm320, %v962, 0.0
    %v1103 = vadd.f32 %v1101, %v1102
    %v1104 = vsel %vm320, %v963, 0.0
    %v1105 = vadd.f32 %v1103, %v1104
    %v1106 = vsel %vm320, %v964, 0.0
    %v1107 = vadd.f32 %v1105, %v1106
    %1108 = vadd.xlane.f32.xlu0 %v1107
    %v1109 = vpop.xlane.xlu0 %1108
    %s1110 = sld [smem:[#allocation8 + $0x1]]
    %v1111 = vstv %s1110
    %v1112 = vadd.f32 %v1109, %v1111
    %v1113 = vmax.f32 %v603, %v1112
    %v1114 = vsub.f32 %v603, %v1113
    %v1115 = vmul.f32 %v1114, 1.442695
    %v1116 = vpow.pop %v1115
    %v1117 = vsub.f32 %v1112, %v1113
    %v1118 = vmul.f32 %v1117, 1.442695
    %v1119 = vpow.pop %v1118
    %v1120 = vadd.f32 %v1116, %v1119
    %v1121 = vrcp.pop %v1120
    %v1122 = vmul.f32 %v1120, %v1121
    %v1123 = vsub.f32 1.0, %v1122
    %v1124 = vmul.f32 %v1121, %v1123
    %v1125 = vadd.f32 %v1121, %v1124
    %vm1126 = vweird.f32 %v1120
    %vm1127 = vweird.f32 %v1121
    %vm1128 = vmor %vm1126, %vm1127
    %v1129 = vsel %vm1128, %v1121, %v1125
    %v1130 = vand.u32 2147483647, %v1120
    %vm1131 = vcmp.eq.f32.partialorder %v1130, 8.507059e+37
    %v1132 = vand.u32 %v1120, 2147483648
    %v1133 = vor.u32 1.1754944e-38, %v1132
    %v1134 = vsel %vm1131, %v1133, %v1129
    %v1135 = vmul.f32 1.0, %v1134
    %v1136 = vmul.f32 %v1116, %v1135
    %v1137 = vmul.f32 %v1119, %v1135
    %vm1138 = vcmask 7168
    %v1139 = vsel %vm1138, %v1136, %v1137
    %vm1140 = vcmask 9216
    %1141 = vst.msk [vmem:[#allocation9] sm:$0x3] %vm1140, %v1139
    // Predicated region
    $region26: #{tpu_custom_call.1} parent=1 // pred_check
      _
    $region27: #{tpu_custom_call.1} parent=1 // pred_check_branch
      %1143 = sbr.rel (0) target = $region29
    $region28: #{tpu_custom_call.1} parent=1 // pred_region
      %1145 = vsyncadd [#allocation4], 0
      %s1147 = sshll.u32 [#allocation9], 4
      %s1148 = int_to_ptr.vmem [resolvable:$true] %s1147
      %s1149 = sshll.u32 %s3, 4
      %s1150 = int_to_ptr.hbm [resolvable:$true] %s1149
      %1152 = dma.vmem_to_hbm [thread:$0]  %s1148, 32, %s1150, [#allocation4]
    $region29: #{tpu_custom_call.1} parent=1 // pred_fallthru
      _
    // Predicated region
    $region30: #{tpu_custom_call.1} parent=1 // pred_check
      _
    $region31: #{tpu_custom_call.1} parent=1 // pred_check_branch
      %1154 = sbr.rel (0) target = $region33
    $region32: #{tpu_custom_call.1} parent=1 // pred_region
      %1156 = dma.done [#allocation4], 32
    $region33: #{tpu_custom_call.1} parent=1 // pred_fallthru
      _
    %1157 = vsyncpa [#allocation3], 1
    %1158 = vsyncpa [#allocation7], 1
    %1159 = vsyncpa [#allocation4], 1
    %1160 = vsyncpa [#allocation5], 1

</llo_original>
